<compile_context>
chip_gen: v5e
topology: v5e:2x2
jax: 0.10.0
libtpu: 0.0.40
codegen_flags: <defaults>
</compile_context>

<pallas_src>
import functools

import jax
import jax.numpy as jnp
from jax import lax
from jax.experimental import pallas as pl
from jax.experimental.pallas import tpu as pltpu


def _triplet_kernel(emb_ref, lab_row_ref, lab_col_ref, out_ref, acc_ref, *,
                    margin, epsilon, num_parts, bf16_matmul):
    # emb_ref:     (1, N, C) f32 VMEM   -- the k-th part's embeddings
    # lab_row_ref: (1, N)    i32 VMEM
    # lab_col_ref: (N, 1)    i32 VMEM
    # out_ref:     (3,)      f32 SMEM   -- [triplet_loss, trivial_ratio, valid_ratio]
    # acc_ref:     (N, N)    f32 VMEM scratch (sum of per-part distances)
    k = pl.program_id(0)
    emb = emb_ref[0]                                       # (N, C) f32
    N = emb.shape[0]

    # ---- per-part pairwise sqrt-distance matrix -----------------------------
    # squared norms directly (no eye-masked diagonal extraction)
    sq = jnp.sum(emb * emb, axis=-1, keepdims=True)        # (N, 1) f32

    emb_mm = emb.astype(jnp.bfloat16) if bf16_matmul else emb
    dot = lax.dot_general(emb_mm, emb_mm,
                          (((1,), (1,)), ((), ())),
                          preferred_element_type=jnp.float32)   # (N, N) f32

    # ||a-b||^2 = |a|^2 - 2<a,b> + |b|^2  (row-broadcast obtained via a single
    # (N,N) transpose instead of materializing a (1,N) norm row)
    half = sq - dot                                        # (N, N)
    dist = half + jnp.transpose(half)                      # (N, N)
    dist = jnp.maximum(dist, 0.0)                          # F.relu
    zero_mask = dist == 0.0
    dist = jnp.sqrt(jnp.where(zero_mask, epsilon, dist))
    dist = jnp.where(zero_mask, 0.0, dist)

    # ---- accumulate parts ----------------------------------------------------
    @pl.when(k == 0)
    def _init():
        acc_ref[...] = jnp.zeros_like(acc_ref)

    acc_ref[...] += dist

    # ---- batch-hard mining + loss (last part only) ---------------------------
    @pl.when(k == num_parts - 1)
    def _finalize():
        pairwise = acc_ref[...] * (1.0 / num_parts)        # mean over K parts

        labels_equal = lab_row_ref[...] == lab_col_ref[...]    # (N, N)
        rows = lax.broadcasted_iota(jnp.int32, (N, N), 0)
        cols = lax.broadcasted_iota(jnp.int32, (N, N), 1)
        not_eye = rows != cols

        ap_mask = jnp.logical_and(not_eye, labels_equal)       # anchor-positive
        an_mask = jnp.logical_not(labels_equal)                # anchor-negative

        max_value = jnp.finfo(jnp.float32).max
        hardest_positive = jnp.max(jnp.where(ap_mask, pairwise, -1.0),
                                   axis=-1, keepdims=True)     # (N, 1)
        hardest_negative = jnp.min(jnp.where(an_mask, pairwise, max_value),
                                   axis=-1, keepdims=True)     # (N, 1)

        valid_f = (hardest_positive != -1.0).astype(jnp.float32)   # (N, 1)
        valid_count = jnp.sum(valid_f)

        losses = jnp.maximum(hardest_positive - hardest_negative + margin, 0.0)
        out_ref[0] = jnp.sum(losses * valid_f) / valid_count
        out_ref[1] = jnp.sum((losses == 0.0).astype(jnp.float32) * valid_f) / valid_count
        out_ref[2] = valid_count / jnp.float32(N)


def part_averaged_triplet_loss(part_based_embeddings, labels,
                               margin=0.3, epsilon=1e-16, bf16_matmul=False):
    """part_based_embeddings: (N, K, C) float32; labels: (N,) int32.

    Returns (triplet_loss, trivial_triplets_ratio, valid_triplets_ratio),
    matching PartAveragedTripletLoss.forward with parts_visibility=None.
    """
    emb_knc = jnp.transpose(part_based_embeddings, (1, 0, 2)).astype(jnp.float32)
    K, N, C = emb_knc.shape
    labels = labels.astype(jnp.int32)
    lab_row = labels.reshape(1, N)
    lab_col = labels.reshape(N, 1)

    # VMEM footprint: acc + a handful of (N,N) temporaries + double-buffered
    # per-part (N,C) block.  Cap at 64 MiB (v7x physical); floor at 32 MiB so
    # the default scoped limit never bites on v5e/v6e.
    est = (8 * N * N + 4 * N * C) * 4 + (2 << 20)
    vmem_limit = int(min(max(est, 32 * 1024 * 1024), 64 * 1024 * 1024))

    kernel = functools.partial(_triplet_kernel,
                               margin=float(margin),
                               epsilon=float(epsilon),
                               num_parts=int(K),
                               bf16_matmul=bool(bf16_matmul))

    out = pl.pallas_call(
        kernel,
        out_shape=jax.ShapeDtypeStruct((3,), jnp.float32),
        grid_spec=pltpu.PrefetchScalarGridSpec(
            num_scalar_prefetch=0,
            grid=(K,),
            in_specs=[
                pl.BlockSpec((1, N, C), lambda k: (k, 0, 0)),   # k-th part slab
                pl.BlockSpec((1, N), lambda k: (0, 0)),         # labels (row)
                pl.BlockSpec((N, 1), lambda k: (0, 0)),         # labels (col)
            ],
            out_specs=pl.BlockSpec((3,), lambda k: (0,),
                                   memory_space=pltpu.MemorySpace.SMEM),
            scratch_shapes=[pltpu.VMEM((N, N), jnp.float32)],
        ),
        compiler_params=pltpu.CompilerParams(
            dimension_semantics=("arbitrary",),   # acc carried across K steps
            vmem_limit_bytes=vmem_limit,
        ),
    )(emb_knc, lab_row, lab_col)
    return out[0], out[1], out[2]


def _reference(part_based_embeddings, labels, margin=0.3, epsilon=1e-16):
    """Pure-JAX mirror of the PyTorch forward (parts_visibility=None)."""
    emb = jnp.transpose(part_based_embeddings, (1, 0, 2)).astype(jnp.float32)
    K, N, C = emb.shape
    dot = jnp.einsum('knc,kmc->knm', emb, emb, preferred_element_type=jnp.float32)
    sq = jnp.diagonal(dot, axis1=1, axis2=2)
    dist = sq[:, :, None] - 2.0 * dot + sq[:, None, :]
    dist = jnp.maximum(dist, 0.0)
    m0 = (dist == 0.0).astype(jnp.float32)
    dist = jnp.sqrt(dist + m0 * epsilon) * (1.0 - m0)
    pw = dist.mean(0)

    eq = labels[None, :] == labels[:, None]
    not_eye = ~jnp.eye(N, dtype=bool)
    ap = (not_eye & eq).astype(jnp.float32)
    an = (~eq).astype(jnp.float32)
    max_value = jnp.finfo(jnp.float32).max
    hp = jnp.max(pw * ap - (1.0 - ap), axis=-1)
    hn = jnp.min(pw * an + (1.0 - an) * max_value, axis=-1)
    valid = (hp != -1.0).astype(jnp.float32)
    cnt = valid.sum()
    l = jnp.maximum(hp - hn + margin, 0.0)
    loss = (l * valid).sum() / cnt
    triv = ((l == 0.0).astype(jnp.float32) * valid).sum() / cnt
    vr = cnt / N
    return loss, triv, vr


if __name__ == "__main__":
    key = jax.random.PRNGKey(0)
    N, K, C = 8, 3, 32   # batch, parts, feature dim
    embeddings = jax.random.normal(key, (N, K, C), dtype=jnp.float32)
    labels = jnp.array([0, 0, 1, 1, 2, 2, 3, 3], dtype=jnp.int32)

    loss, trivial_ratio, valid_ratio = part_averaged_triplet_loss(
        embeddings, labels, margin=0.3, epsilon=1e-16)
    jax.block_until_ready((loss, trivial_ratio, valid_ratio))

    # sanity check against the pure-JAX / torch-equivalent reference
    r_loss, r_triv, r_vr = _reference(embeddings, labels)
    assert jnp.allclose(loss, r_loss, atol=1e-3), (loss, r_loss)
    assert jnp.allclose(trivial_ratio, r_triv, atol=1e-6), (trivial_ratio, r_triv)
    assert jnp.allclose(valid_ratio, r_vr, atol=1e-6), (valid_ratio, r_vr)

    print("KERNEL_OK")
</pallas_src>

<mosaic_0001>
module attributes {stable_mosaic.version = 11 : i64} {
  func.func @_triplet_kernel(%arg0: i32, %arg1: memref<1x8x32xf32, #tpu.memory_space<vmem>>, %arg2: memref<1x8xi32, #tpu.memory_space<vmem>>, %arg3: memref<8x1xi32, #tpu.memory_space<vmem>>, %arg4: memref<3xf32, #tpu.memory_space<smem>>, %arg5: memref<8x8xf32, #tpu.memory_space<vmem>>) attributes {dimension_semantics = [#tpu.dimension_semantics<arbitrary>], iteration_bounds = array<i64: 3>, scalar_prefetch = 0 : i64, scratch_operands = 1 : i64, tpu.core_type = #tpu.core_type<tc>, window_params = [{transform_indices = @transform_0, window_bounds = array<i64: 1, 8, 32>}, {pipeline_mode = #tpu.pipeline_mode<synchronous>, transform_indices = @transform_1, window_bounds = array<i64: 1, 8>}, {pipeline_mode = #tpu.pipeline_mode<synchronous>, transform_indices = @transform_2, window_bounds = array<i64: 8, 1>}, {transform_indices = @transform_3, window_bounds = array<i64: 3>}]} {
    %c0 = arith.constant 0 : index
    %c0_0 = arith.constant 0 : index
    %c0_1 = arith.constant 0 : index
    %0 = vector.load %arg1[%c0, %c0_0, %c0_1] : memref<1x8x32xf32, #tpu.memory_space<vmem>>, vector<1x8x32xf32>
    %1 = vector.shape_cast %0 : vector<1x8x32xf32> to vector<8x32xf32>
    %2 = arith.mulf %1, %1 : vector<8x32xf32>
    %cst = arith.constant dense<0.000000e+00> : vector<8xf32>
    %3 = vector.multi_reduction <add>, %2, %cst [1] : vector<8x32xf32> to vector<8xf32>
    %4 = vector.shape_cast %3 : vector<8xf32> to vector<8x1xf32>
    %cst_2 = arith.constant dense<0.000000e+00> : vector<8x8xf32>
    %5 = tpu.matmul %1, %1, %cst_2 {dimension_numbers = #tpu.dot_dimension_numbers<[1], [1], [0], [0], [0, 0, 1, 0], [], []>} : vector<8x32xf32>, vector<8x32xf32>, vector<8x8xf32> -> vector<8x8xf32>
    %6 = vector.broadcast %4 : vector<8x1xf32> to vector<8x8xf32>
    %7 = arith.subf %6, %5 : vector<8x8xf32>
    %8 = tpu.transpose %7, [1, 0] : vector<8x8xf32> -> vector<8x8xf32>
    %9 = arith.addf %7, %8 : vector<8x8xf32>
    %cst_3 = arith.constant 0.000000e+00 : f32
    %10 = vector.broadcast %cst_3 : f32 to vector<8x8xf32>
    %11 = arith.maximumf %9, %10 : vector<8x8xf32>
    %cst_4 = arith.constant 0.000000e+00 : f32
    %12 = vector.broadcast %cst_4 : f32 to vector<8x8xf32>
    %13 = arith.cmpf oeq, %11, %12 : vector<8x8xf32>
    %cst_5 = arith.constant 1.000000e-16 : f32
    %14 = vector.broadcast %cst_5 : f32 to vector<8x8xf32>
    %15 = arith.select %13, %14, %11 : vector<8x8xi1>, vector<8x8xf32>
    %16 = math.sqrt %15 : vector<8x8xf32>
    %cst_6 = arith.constant 0.000000e+00 : f32
    %17 = vector.broadcast %cst_6 : f32 to vector<8x8xf32>
    %18 = arith.select %13, %17, %16 : vector<8x8xi1>, vector<8x8xf32>
    %c0_i32 = arith.constant 0 : i32
    %19 = arith.cmpi eq, %arg0, %c0_i32 : i32
    %20 = arith.extui %19 : i1 to i32
    %c0_i32_7 = arith.constant 0 : i32
    %21 = arith.cmpi ne, %20, %c0_i32_7 : i32
    scf.if %21 {
      %cst_13 = arith.constant 0.000000e+00 : f32
      %28 = vector.broadcast %cst_13 : f32 to vector<8x8xf32>
      %c0_14 = arith.constant 0 : index
      %c0_15 = arith.constant 0 : index
      %29 = vector.load %arg5[%c0_14, %c0_15] : memref<8x8xf32, #tpu.memory_space<vmem>>, vector<8x8xf32>
      tpu.vector_store %arg5[%c0_14, %c0_15], %28 {strides = array<i32>} : memref<8x8xf32, #tpu.memory_space<vmem>>, vector<8x8xf32>,
    } else {
    }
    %c0_8 = arith.constant 0 : index
    %c0_9 = arith.constant 0 : index
    %22 = vector.load %arg5[%c0_8, %c0_9] : memref<8x8xf32, #tpu.memory_space<vmem>>, vector<8x8xf32>
    %23 = arith.addf %22, %18 : vector<8x8xf32>
    %c0_10 = arith.constant 0 : index
    %c0_11 = arith.constant 0 : index
    %24 = vector.load %arg5[%c0_10, %c0_11] : memref<8x8xf32, #tpu.memory_space<vmem>>, vector<8x8xf32>
    tpu.vector_store %arg5[%c0_10, %c0_11], %23 {strides = array<i32>} : memref<8x8xf32, #tpu.memory_space<vmem>>, vector<8x8xf32>,
    %c2_i32 = arith.constant 2 : i32
    %25 = arith.cmpi eq, %arg0, %c2_i32 : i32
    %26 = arith.extui %25 : i1 to i32
    %c0_i32_12 = arith.constant 0 : i32
    %27 = arith.cmpi ne, %26, %c0_i32_12 : i32
    scf.if %27 {
      %c0_13 = arith.constant 0 : index
      %c0_14 = arith.constant 0 : index
      %28 = vector.load %arg5[%c0_13, %c0_14] : memref<8x8xf32, #tpu.memory_space<vmem>>, vector<8x8xf32>
      %cst_15 = arith.constant 0.333333343 : f32
      %29 = vector.broadcast %cst_15 : f32 to vector<8x8xf32>
      %30 = arith.mulf %28, %29 : vector<8x8xf32>
      %c0_16 = arith.constant 0 : index
      %c0_17 = arith.constant 0 : index
      %31 = vector.load %arg2[%c0_16, %c0_17] : memref<1x8xi32, #tpu.memory_space<vmem>>, vector<1x8xi32>
      %c0_18 = arith.constant 0 : index
      %c0_19 = arith.constant 0 : index
      %32 = vector.load %arg3[%c0_18, %c0_19] : memref<8x1xi32, #tpu.memory_space<vmem>>, vector<8x1xi32>
      %33 = vector.broadcast %31 : vector<1x8xi32> to vector<8x8xi32>
      %34 = vector.broadcast %32 : vector<8x1xi32> to vector<8x8xi32>
      %35 = arith.cmpi eq, %33, %34 : vector<8x8xi32>
      %36 = tpu.iota {dimensions = array<i32: 0>} : vector<8x8xi32>
      %37 = tpu.iota {dimensions = array<i32: 1>} : vector<8x8xi32>
      %38 = arith.cmpi ne, %36, %37 : vector<8x8xi32>
      %39 = arith.andi %38, %35 : vector<8x8xi1>
      %cst_20 = arith.constant dense<true> : vector<8x8xi1>
      %40 = arith.xori %35, %cst_20 : vector<8x8xi1>
      %cst_21 = arith.constant -1.000000e+00 : f32
      %41 = vector.broadcast %cst_21 : f32 to vector<8x8xf32>
      %42 = arith.select %39, %30, %41 : vector<8x8xi1>, vector<8x8xf32>
      %cst_22 = arith.constant dense<0xFF800000> : vector<8xf32>
      %43 = vector.multi_reduction <maximumf>, %42, %cst_22 [1] : vector<8x8xf32> to vector<8xf32>
      %44 = vector.shape_cast %43 : vector<8xf32> to vector<8x1xf32>
      %cst_23 = arith.constant 3.40282347E+38 : f32
      %45 = vector.broadcast %cst_23 : f32 to vector<8x8xf32>
      %46 = arith.select %40, %30, %45 : vector<8x8xi1>, vector<8x8xf32>
      %cst_24 = arith.constant dense<0x7F800000> : vector<8xf32>
      %47 = vector.multi_reduction <minimumf>, %46, %cst_24 [1] : vector<8x8xf32> to vector<8xf32>
      %48 = vector.shape_cast %47 : vector<8xf32> to vector<8x1xf32>
      %cst_25 = arith.constant -1.000000e+00 : f32
      %49 = vector.broadcast %cst_25 : f32 to vector<8x1xf32>
      %50 = arith.cmpf one, %44, %49 : vector<8x1xf32>
      %51 = arith.extui %50 : vector<8x1xi1> to vector<8x1xi32>
      %52 = arith.sitofp %51 : vector<8x1xi32> to vector<8x1xf32>
      %53 = vector.shape_cast %52 : vector<8x1xf32> to vector<1x8x1xf32>
      %cst_26 = arith.constant dense<0.000000e+00> : vector<1xf32>
      %54 = vector.multi_reduction <add>, %53, %cst_26 [1, 2] : vector<1x8x1xf32> to vector<1xf32>
      %55 = vector.shape_cast %54 : vector<1xf32> to vector<1x1x1xf32>
      %56 = vector.extract %55[0, 0, 0] : f32 from vector<1x1x1xf32>
      %57 = arith.subf %44, %48 : vector<8x1xf32>
      %cst_27 = arith.constant 3.000000e-01 : f32
      %58 = vector.broadcast %cst_27 : f32 to vector<8x1xf32>
      %59 = arith.addf %57, %58 : vector<8x1xf32>
      %cst_28 = arith.constant 0.000000e+00 : f32
      %60 = vector.broadcast %cst_28 : f32 to vector<8x1xf32>
      %61 = arith.maximumf %59, %60 : vector<8x1xf32>
      %62 = arith.mulf %61, %52 : vector<8x1xf32>
      %63 = vector.shape_cast %62 : vector<8x1xf32> to vector<1x8x1xf32>
      %cst_29 = arith.constant dense<0.000000e+00> : vector<1xf32>
      %64 = vector.multi_reduction <add>, %63, %cst_29 [1, 2] : vector<1x8x1xf32> to vector<1xf32>
      %65 = vector.shape_cast %64 : vector<1xf32> to vector<1x1x1xf32>
      %66 = vector.extract %65[0, 0, 0] : f32 from vector<1x1x1xf32>
      %67 = arith.divf %66, %56 : f32
      %c0_30 = arith.constant 0 : index
      %68 = memref.load %arg4[%c0_30] : memref<3xf32, #tpu.memory_space<smem>>
      memref.store %67, %arg4[%c0_30] : memref<3xf32, #tpu.memory_space<smem>>
      %cst_31 = arith.constant 0.000000e+00 : f32
      %69 = vector.broadcast %cst_31 : f32 to vector<8x1xf32>
      %70 = arith.cmpf oeq, %61, %69 : vector<8x1xf32>
      %71 = arith.extui %70 : vector<8x1xi1> to vector<8x1xi32>
      %72 = arith.sitofp %71 : vector<8x1xi32> to vector<8x1xf32>
      %73 = arith.mulf %72, %52 : vector<8x1xf32>
      %74 = vector.shape_cast %73 : vector<8x1xf32> to vector<1x8x1xf32>
      %cst_32 = arith.constant dense<0.000000e+00> : vector<1xf32>
      %75 = vector.multi_reduction <add>, %74, %cst_32 [1, 2] : vector<1x8x1xf32> to vector<1xf32>
      %76 = vector.shape_cast %75 : vector<1xf32> to vector<1x1x1xf32>
      %77 = vector.extract %76[0, 0, 0] : f32 from vector<1x1x1xf32>
      %78 = arith.divf %77, %56 : f32
      %c1 = arith.constant 1 : index
      %79 = memref.load %arg4[%c1] : memref<3xf32, #tpu.memory_space<smem>>
      memref.store %78, %arg4[%c1] : memref<3xf32, #tpu.memory_space<smem>>
      %cst_33 = arith.constant 8.000000e+00 : f32
      %80 = arith.divf %56, %cst_33 : f32
      %c2 = arith.constant 2 : index
      %81 = memref.load %arg4[%c2] : memref<3xf32, #tpu.memory_space<smem>>
      memref.store %80, %arg4[%c2] : memref<3xf32, #tpu.memory_space<smem>>
    } else {
    }
    return
  }
  func.func @transform_0(%arg0: i32) -> (i32, i32, i32) {
    %c0_i32 = arith.constant 0 : i32
    %c0_i32_0 = arith.constant 0 : i32
    %c0_i32_1 = arith.constant 0 : i32
    return %arg0, %c0_i32, %c0_i32_0 : i32, i32, i32
  }
  func.func @transform_1(%arg0: i32) -> (i32, i32) {
    %c0_i32 = arith.constant 0 : i32
    %c0_i32_0 = arith.constant 0 : i32
    %c0_i32_1 = arith.constant 0 : i32
    return %c0_i32, %c0_i32_0 : i32, i32
  }
  func.func @transform_2(%arg0: i32) -> (i32, i32) {
    %c0_i32 = arith.constant 0 : i32
    %c0_i32_0 = arith.constant 0 : i32
    %c0_i32_1 = arith.constant 0 : i32
    return %c0_i32, %c0_i32_0 : i32, i32
  }
  func.func @transform_3(%arg0: i32) -> i32 {
    %c0_i32 = arith.constant 0 : i32
    %c0_i32_0 = arith.constant 0 : i32
    return %c0_i32 : i32
  }
}

</mosaic_0001>

<llo_original>
// kernel: tpu_custom_call.1
$region0: #{tpu_custom_call.1}
  #allocation0 [shape = 'u32[]', space=smem, size = 0x4, offset = 0x4, fixed_abs, tag = 'smem constant byte address 0x4 - core index']
  #allocation1 [shape = 'u32[72,128]{1,0:T(1,128)}', space=vmem, size = 0x9000, scoped, tag = 'internal scratch']
  #allocation2 [shape = 'f32[8,8]{1,0:T(8,128)}', space=vmem, size = 0x1000, scoped, tag = 'scratch operand']
  %s0 = inlined_call_operand.hbm [shape: f32[3,8,32], index: 0, kind: input, shape index: {}]
  %s1 = inlined_call_operand.vmem [shape: s32[1,8], index: 1, kind: input, shape index: {}]
  %s2 = inlined_call_operand.vmem [shape: s32[8,1], index: 2, kind: input, shape index: {}]
  %s3 = inlined_call_operand.hbm [shape: f32[3], index: 3, kind: output, shape index: {}]
  %s4 = sld [smem:[#allocation0]]
  $region57: #{tpu_custom_call.1} parent=0
    _
  %s6 = ssub.s32 1, %s4
  %s7 = scalar_select 0, %s6, %s4
  $region1: #{tpu_custom_call.1} parent=0
    #allocation3 [shape = 'u8[8192]{0}', space=vmem, size = 0x2000, scoped, tag = 'input window, operand 0']
    #allocation4 [shape = 's32[2]{0}', space=sflag, size = 0x8, scoped, tag = 'scoped memory for tpu_custom_call.1']
    #allocation5 [shape = 's32[2]{0}', space=sflag, size = 0x8, scoped, tag = 'scoped memory for tpu_custom_call.1']
    #allocation6 [shape = 'u8[512]{0}', space=smem, size = 0x200, scoped, tag = 'output window, operand 0, single buffered']
    %8 = vsyncpa [#allocation4], 0
    %s9 = scalar_lea.sflag [#allocation4], 1
    %10 = vsyncpa %s9, 0
    %11 = vsyncpa [#allocation5], 0
    loop: start=0, step=1, limit=5
    $region2: #{tpu_custom_call.1} parent=1 // loop_pre_header
      _
    $region3: #{tpu_custom_call.1} parent=1 // loop_header
      %s13 = sphi 0, %s17
      %p14 = scmp.ge.s32.totalorder %s13, 5
      %s23 = sphi 0, %s25
      %s26 = sphi 0, %s23
      %s27 = sphi 0, %s26
      %s43 = sphi 0, %s27
      %s47 = sphi 0, %s47
      %s49 = sphi 0, %s47
      %s50 = sphi 0, %s49
      %s64 = sphi 0, %s50
      %s68 = sphi 0, %s68
      %s70 = sphi 0, %s68
      %s71 = sphi 0, %s70
      %s85 = sphi 0, %s71
      %s89 = sphi 0, %s89
      %s91 = sphi 0, %s89
      %s92 = sphi 0, %s91
      %s106 = sphi 0, %s92
    $region4: #{tpu_custom_call.1} parent=1 // loop_header_branch
      %16 = sbr.rel (%p14) target = $region8
    $region5: #{tpu_custom_call.1} parent=1 // loop_body
      %s18 = ssub.s32 %s13, 1
      %s19 = ssub.s32 %s13, 2
      %s20 = sadd.s32 %s13, 1
      %s21 = ssub.s32 %s13, %s20
      %p22 = scmp.eq.s32.totalorder %s21, 0
      %s24 = sadd.s32 %s23, 1
      %s25 = scalar_select %p22, %s23, %s24
      %p28 = pneg %p22
      %p29 = scmp.eq.s32.totalorder %s13, 2
      %p30 = por %p28, %p29
      %p31 = scmp.ne.s32.totalorder %s23, %s26
      %p32 = scmp.eq.s32.totalorder %s13, 0
      %p33 = por %p31, %p32
      %p34 = scmp.ne.s32.totalorder %s23, %s26
      %p35 = scmp.eq.s32.totalorder %s18, 2
      %p36 = por %p34, %p35
      %p37 = scmp.ne.s32.totalorder %s26, %s27
      %p38 = scmp.eq.s32.totalorder %s18, 0
      %p39 = por %p37, %p38
      %p40 = scmp.ne.s32.totalorder %s26, %s27
      %p41 = scmp.eq.s32.totalorder %s19, 2
      %p42 = por %p40, %p41
      %p44 = scmp.ne.s32.totalorder %s27, %s43
      %p45 = scmp.eq.s32.totalorder %s19, 0
      %p46 = por %p44, %p45
      %s48 = sadd.s32 %s47, 1
      %p51 = scmp.eq.s32.totalorder %s13, 2
      %p52 = scmp.ne.s32.totalorder %s47, %s49
      %p53 = scmp.eq.s32.totalorder %s13, 0
      %p54 = por %p52, %p53
      %p55 = scmp.ne.s32.totalorder %s47, %s49
      %p56 = scmp.eq.s32.totalorder %s18, 2
      %p57 = por %p55, %p56
      %p58 = scmp.ne.s32.totalorder %s49, %s50
      %p59 = scmp.eq.s32.totalorder %s18, 0
      %p60 = por %p58, %p59
      %p61 = scmp.ne.s32.totalorder %s49, %s50
      %p62 = scmp.eq.s32.totalorder %s19, 2
      %p63 = por %p61, %p62
      %p65 = scmp.ne.s32.totalorder %s50, %s64
      %p66 = scmp.eq.s32.totalorder %s19, 0
      %p67 = por %p65, %p66
      %s69 = sadd.s32 %s68, 1
      %p72 = scmp.eq.s32.totalorder %s13, 2
      %p73 = scmp.ne.s32.totalorder %s68, %s70
      %p74 = scmp.eq.s32.totalorder %s13, 0
      %p75 = por %p73, %p74
      %p76 = scmp.ne.s32.totalorder %s68, %s70
      %p77 = scmp.eq.s32.totalorder %s18, 2
      %p78 = por %p76, %p77
      %p79 = scmp.ne.s32.totalorder %s70, %s71
      %p80 = scmp.eq.s32.totalorder %s18, 0
      %p81 = por %p79, %p80
      %p82 = scmp.ne.s32.totalorder %s70, %s71
      %p83 = scmp.eq.s32.totalorder %s19, 2
      %p84 = por %p82, %p83
      %p86 = scmp.ne.s32.totalorder %s71, %s85
      %p87 = scmp.eq.s32.totalorder %s19, 0
      %p88 = por %p86, %p87
      %s90 = sadd.s32 %s89, 1
      %p93 = scmp.eq.s32.totalorder %s13, 2
      %p94 = scmp.ne.s32.totalorder %s89, %s91
      %p95 = scmp.eq.s32.totalorder %s13, 0
      %p96 = por %p94, %p95
      %p97 = scmp.ne.s32.totalorder %s89, %s91
      %p98 = scmp.eq.s32.totalorder %s18, 2
      %p99 = por %p97, %p98
      %p100 = scmp.ne.s32.totalorder %s91, %s92
      %p101 = scmp.eq.s32.totalorder %s18, 0
      %p102 = por %p100, %p101
      %p103 = scmp.ne.s32.totalorder %s91, %s92
      %p104 = scmp.eq.s32.totalorder %s19, 2
      %p105 = por %p103, %p104
      %p107 = scmp.ne.s32.totalorder %s92, %s106
      %p108 = scmp.eq.s32.totalorder %s19, 0
      %p109 = por %p107, %p108
      %p110 = scmp.le.s32.totalorder 1, %s13
      %p111 = scmp.lt.s32.totalorder %s13, 4
      %p112 = pnand %p110, %p111
      %p113 = pneg %p112
      // Predicated region
      $region9: #{tpu_custom_call.1} parent=5 // pred_check
        _
      $region10: #{tpu_custom_call.1} parent=5 // pred_check_branch
        %115 = sbr.rel (%p112) target = $region12
      $region11: #{tpu_custom_call.1} parent=5 // pred_region
        %s116 = ssub.s32 %s13, 1
        // Predicated region
        $region13: #{tpu_custom_call.1} parent=11 // pred_check
          %p117 = pneg %p60
        $region14: #{tpu_custom_call.1} parent=11 // pred_check_branch
          %119 = sbr.rel (%p117) target = $region16
        $region15: #{tpu_custom_call.1} parent=11 // pred_region
          _
        $region16: #{tpu_custom_call.1} parent=11 // pred_fallthru
          _
        // Predicated region
        $region17: #{tpu_custom_call.1} parent=11 // pred_check
          %p120 = pneg %p81
        $region18: #{tpu_custom_call.1} parent=11 // pred_check_branch
          %122 = sbr.rel (%p120) target = $region20
        $region19: #{tpu_custom_call.1} parent=11 // pred_region
          _
        $region20: #{tpu_custom_call.1} parent=11 // pred_fallthru
          _
      $region12: #{tpu_custom_call.1} parent=5 // pred_fallthru
        _
      %p123 = scmp.lt.s32.totalorder %s13, 3
      // Predicated region
      $region21: #{tpu_custom_call.1} parent=5 // pred_check
        %p124 = pneg %p123
      $region22: #{tpu_custom_call.1} parent=5 // pred_check_branch
        %126 = sbr.rel (%p124) target = $region24
      $region23: #{tpu_custom_call.1} parent=5 // pred_region
        // Predicated region
        $region25: #{tpu_custom_call.1} parent=23 // pred_check
          %p127 = pneg %p33
        $region26: #{tpu_custom_call.1} parent=23 // pred_check_branch
          %129 = sbr.rel (%p127) target = $region28
        $region27: #{tpu_custom_call.1} parent=23 // pred_region
          %s130 = sand.u32 %s23, 1
          %s131 = scalar_lea.sflag [#allocation4], %s130
          %s132 = sand.u32 %s23, 1
          %s133 = smul.addr %s132, 8
          %s134 = scalar_lea.vmem [#allocation3], %s133
          %136 = vsyncadd %s131, 0
          %s137 = smul.addr %s13, 8
          %s138 = scalar_lea.hbm %s0, %s137
          %s140 = sshll.u32 %s138, 4
          %s141 = int_to_ptr.hbm [resolvable:$true] %s140
          %s142 = sshll.u32 %s134, 4
          %s143 = int_to_ptr.vmem [resolvable:$true] %s142
          %145 = dma.hbm_to_vmem [thread:$0]  %s141, 128, %s143, %s131
        $region28: #{tpu_custom_call.1} parent=23 // pred_fallthru
          _
      $region24: #{tpu_custom_call.1} parent=5 // pred_fallthru
        _
      %p146 = scmp.le.s32.totalorder 1, %s13
      %p147 = scmp.lt.s32.totalorder %s13, 4
      %p148 = pnand %p146, %p147
      %p149 = pneg %p148
      // Predicated region
      $region29: #{tpu_custom_call.1} parent=5 // pred_check
        _
      $region30: #{tpu_custom_call.1} parent=5 // pred_check_branch
        %151 = sbr.rel (%p148) target = $region32
      $region31: #{tpu_custom_call.1} parent=5 // pred_region
        %s152 = ssub.s32 %s13, 1
        %s153 = sand.u32 %s26, 1
        %s154 = scalar_lea.sflag [#allocation4], %s153
        %s155 = sand.u32 %s26, 1
        %s156 = smul.addr %s155, 8
        %s157 = scalar_lea.vmem [#allocation3], %s156
        // Predicated region
        $region33: #{tpu_custom_call.1} parent=31 // pred_check
          %p158 = pneg %p39
        $region34: #{tpu_custom_call.1} parent=31 // pred_check_branch
          %160 = sbr.rel (%p158) target = $region36
        $region35: #{tpu_custom_call.1} parent=31 // pred_region
          %162 = dma.done %s154, 128
        $region36: #{tpu_custom_call.1} parent=31 // pred_fallthru
          _
        %s163 = sand.u32 %s26, 1
        %s164 = scalar_lea.sflag [#allocation4], %s163
        %s165 = sand.u32 %s26, 1
        %s166 = smul.addr %s165, 8
        %s167 = scalar_lea.vmem [#allocation3], %s166
        %p168 = pneg %p39
        %p169 = pneg %p36
        %p170 = pneg %p60
        %p171 = pneg %p57
        %p172 = pneg %p81
        %p173 = pneg %p78
        %p174 = pneg %p102
        %p175 = pneg %p99
        %v176 = vld [vmem:[%s157] sm:$0xff]
        %v177 = vmul.f32 %v176, %v176
        %vm178 = vcmask 261120
        %v179 = vsel %vm178, %v177, 0.0
        %180 = vadd.xlane.f32.xlu0 %v179
        %v181 = vpop.xlane.xlu0 %180
        %v183 = vsel %vm178, %v176, 0
        %185 = vmatpush.xpose.msra.mxu0 0.0
        %186 = vmatpush.xpose.msra.mxu0 0.0
        %187 = vmatpush.xpose.msra.mxu0 0.0
        %188 = vmatpush.xpose.msra.mxu0 0.0
        %189 = vmatpush.xpose.msra.mxu0 0.0
        %190 = vmatpush.xpose.msra.mxu0 0.0
        %191 = vmatpush.xpose.msra.mxu0 0.0
        %192 = vmatpush.xpose.msra.mxu0 0.0
        %193 = vmatpush.xpose.msra.mxu0 0.0
        %194 = vmatpush.xpose.msra.mxu0 0.0
        %195 = vmatpush.xpose.msra.mxu0 0.0
        %196 = vmatpush.xpose.msra.mxu0 0.0
        %197 = vmatpush.xpose.msra.mxu0 0.0
        %198 = vmatpush.xpose.msra.mxu0 0.0
        %199 = vmatpush.xpose.msra.mxu0 0.0
        %200 = vmatpush.xpose.msra.mxu0 %v183
        %201 = vmatmul.f32.gmra.mxu0 %v183
        %v202 = vpop.f32.mrf.mxu0
        %v203 = vadd.f32 0.0, %v202
        %204 = vdwg.mxu0
        %v205 = vsub.f32 %v181, %v203
        %206 = vxpose.xlu0.b32.start [1/16] %v205, 128
        %207 = vxpose.xlu0.b32.cont [2/16] 0.0, 128
        %208 = vxpose.xlu0.b32.cont [3/16] 0.0, 128
        %209 = vxpose.xlu0.b32.cont [4/16] 0.0, 128
        %210 = vxpose.xlu0.b32.cont [5/16] 0.0, 128
        %211 = vxpose.xlu0.b32.cont [6/16] 0.0, 128
        %212 = vxpose.xlu0.b32.cont [7/16] 0.0, 128
        %213 = vxpose.xlu0.b32.cont [8/16] 0.0, 128
        %214 = vxpose.xlu0.b32.cont [9/16] 0.0, 128
        %215 = vxpose.xlu0.b32.cont [10/16] 0.0, 128
        %216 = vxpose.xlu0.b32.cont [11/16] 0.0, 128
        %217 = vxpose.xlu0.b32.cont [12/16] 0.0, 128
        %218 = vxpose.xlu0.b32.cont [13/16] 0.0, 128
        %219 = vxpose.xlu0.b32.cont [14/16] 0.0, 128
        %220 = vxpose.xlu0.b32.cont [15/16] 0.0, 128
        %221 = vxpose.xlu0.b32.end [16/16] 0.0, 128
        %v222 = vpop.trf.xlu0
        %v223 = vpop.trf.xlu0
        %v224 = vpop.trf.xlu0
        %v225 = vpop.trf.xlu0
        %v226 = vpop.trf.xlu0
        %v227 = vpop.trf.xlu0
        %v228 = vpop.trf.xlu0
        %v229 = vpop.trf.xlu0
        %v230 = vpop.trf.xlu0
        %v231 = vpop.trf.xlu0
        %v232 = vpop.trf.xlu0
        %v233 = vpop.trf.xlu0
        %v234 = vpop.trf.xlu0
        %v235 = vpop.trf.xlu0
        %v236 = vpop.trf.xlu0
        %v237 = vpop.trf.xlu0
        %v238 = vadd.f32 %v205, %v222
        %v239 = vmax.f32 %v238, 0.0
        %vm240 = vcmp.eq.f32.partialorder %v239, 0.0
        %v241 = vsel %vm240, 1e-16, %v239
        %v242 = vrsqrt.pop %v241
        %v243 = vmul.f32 %v242, %v241
        %v244 = vmul.f32 %v243, %v242
        %v245 = vmul.f32 0.5, %v244
        %v246 = vsub.f32 1.5, %v245
        %v247 = vmul.f32 %v242, %v246
        %v248 = vmul.f32 %v241, %v247
        %vm249 = vcmp.eq.f32.partialorder %v241, inf
        %v250 = vsel %vm249, %v241, %v248
        %vm251 = vcmp.eq.f32.partialorder %v241, 0.0
        %v252 = vand.u32 %v241, 2147483648
        %v253 = vsel %vm251, %v252, %v250
        %v254 = vsel %vm240, 0.0, %v253
        %p255 = scmp.eq.s32.totalorder %s18, 0
        // Predicated region
        $region37: #{tpu_custom_call.1} parent=31 // pred_check
          %p256 = pneg %p255
        $region38: #{tpu_custom_call.1} parent=31 // pred_check_branch
          %258 = sbr.rel (%p256) target = $region40
        $region39: #{tpu_custom_call.1} parent=31 // pred_region
          %vm259 = vcmask 64512
          %260 = vst.msk [vmem:[#allocation2] sm:$0xff] %vm259, 0.0
        $region40: #{tpu_custom_call.1} parent=31 // pred_fallthru
          _
        %v261 = vld [vmem:[#allocation2] sm:$0xff]
        %v262 = vadd.f32 %v261, %v254
        %vm263 = vcmask 64512
        %264 = vst.msk [vmem:[#allocation2] sm:$0xff] %vm263, %v262
        %p265 = scmp.eq.s32.totalorder %s18, 2
        // Predicated region
        $region41: #{tpu_custom_call.1} parent=31 // pred_check
          %p266 = pneg %p265
        $region42: #{tpu_custom_call.1} parent=31 // pred_check_branch
          %268 = sbr.rel (%p266) target = $region44
        $region43: #{tpu_custom_call.1} parent=31 // pred_region
          %v269 = vld [vmem:[#allocation2] sm:$0xff]
          %v270 = vmul.f32 %v269, 0.33333334
          %v271 = vld [vmem:[%s1] sm:$0x1]
          %v272 = vld [vmem:[%s2] sm:$0xff]
          %v273 = vperm.slane %v271, 0
          %274 = vset.pattern.permute.xlu0 0
          %275 = vperm.xlu0 %274, %v272
          %v276 = vpop.permute.xlu0 %275
          %vm277 = vcmp.eq.s32.totalorder %v273, %v276
          %v278 = vlaneseq
          %v279 = vshrl.u32 %v278, 7
          %v280 = vlaneseq
          %v281 = vand.u32 %v280, 127
          %vm282 = vcmp.ne.s32.totalorder %v279, %v281
          %vm283 = vmand %vm282, %vm277
          %vm284 = vmxor %vm277, 1
          %v285 = vsel %vm283, %v270, -1.0
          %v286 = vsel %vm263, %v285, -inf
          %287 = vmax.xlane.f32.xlu0 %v286
          %v288 = vpop.xlane.xlu0 %287
          %v289 = vsel %vm284, %v270, 3.4028235e+38
          %v290 = vsel %vm263, %v289, inf
          %291 = vmin.xlane.f32.xlu0 %v290
          %v292 = vpop.xlane.xlu0 %291
          %vm293 = vcmp.ne.f32.partialorder %v288, -1.0
          %v294 = vsel %vm293, 1, 0
          %v295 = vcvt.s32.f32 %v294
          %vm296 = vcmask 7168
          %v297 = vsel %vm296, %v295, 0.0
          %298 = vadd.xlane.f32.xlu0 %v297
          %v299 = vpop.xlane.xlu0 %298
          %v300 = vrot.slane %v299, 4
          %v301 = vadd.f32 %v299, %v300
          %v302 = vrot.slane %v301, 2
          %v303 = vadd.f32 %v301, %v302
          %v304 = vrot.slane %v303, 1
          %v305 = vadd.f32 %v303, %v304
          %s306 = vtos %v305
          %v307 = vsub.f32 %v288, %v292
          %v308 = vadd.f32 %v307, 0.3
          %v309 = vmax.f32 %v308, 0.0
          %v310 = vmul.f32 %v309, %v295
          %v311 = vsel %vm296, %v310, 0.0
          %312 = vadd.xlane.f32.xlu0 %v311
          %v313 = vpop.xlane.xlu0 %312
          %v314 = vrot.slane %v313, 4
          %v315 = vadd.f32 %v313, %v314
          %v316 = vrot.slane %v315, 2
          %v317 = vadd.f32 %v315, %v316
          %v318 = vrot.slane %v317, 1
          %v319 = vadd.f32 %v317, %v318
          %s320 = vtos %v319
          %v321 = vstv %s306
          %v322 = vrcp.pop %v321
          %v323 = vmul.f32 %v321, %v322
          %v324 = vsub.f32 1.0, %v323
          %v325 = vmul.f32 %v322, %v324
          %v326 = vadd.f32 %v322, %v325
          %vm327 = vweird.f32 %v321
          %vm328 = vweird.f32 %v322
          %vm329 = vmor %vm327, %vm328
          %v330 = vsel %vm329, %v322, %v326
          %v331 = vand.u32 2147483647, %v321
          %vm332 = vcmp.eq.f32.partialorder %v331, 8.507059e+37
          %v333 = vand.u32 %v321, 2147483648
          %v334 = vor.u32 1.1754944e-38, %v333
          %v335 = vsel %vm332, %v334, %v330
          %s336 = vtos %v335
          %s337 = smul.f32 %s320, %s336
          %s338 = scalar_lea.smem [#allocation6], 0
          %339 = sst [smem:[%s338]] %s337
          %vm340 = vcmp.eq.f32.partialorder %v309, 0.0
          %v341 = vsel %vm340, 1, 0
          %v342 = vcvt.s32.f32 %v341
          %v343 = vmul.f32 %v342, %v295
          %v344 = vsel %vm296, %v343, 0.0
          %345 = vadd.xlane.f32.xlu0 %v344
          %v346 = vpop.xlane.xlu0 %345
          %v347 = vrot.slane %v346, 4
          %v348 = vadd.f32 %v346, %v347
          %v349 = vrot.slane %v348, 2
          %v350 = vadd.f32 %v348, %v349
          %v351 = vrot.slane %v350, 1
          %v352 = vadd.f32 %v350, %v351
          %s353 = vtos %v352
          %v354 = vstv %s306
          %v355 = vrcp.pop %v354
          %v356 = vmul.f32 %v354, %v355
          %v357 = vsub.f32 1.0, %v356
          %v358 = vmul.f32 %v355, %v357
          %v359 = vadd.f32 %v355, %v358
          %vm360 = vweird.f32 %v354
          %vm361 = vweird.f32 %v355
          %vm362 = vmor %vm360, %vm361
          %v363 = vsel %vm362, %v355, %v359
          %v364 = vand.u32 2147483647, %v354
          %vm365 = vcmp.eq.f32.partialorder %v364, 8.507059e+37
          %v366 = vand.u32 %v354, 2147483648
          %v367 = vor.u32 1.1754944e-38, %v366
          %v368 = vsel %vm365, %v367, %v363
          %s369 = vtos %v368
          %s370 = smul.f32 %s353, %s369
          %s371 = scalar_lea.smem [#allocation6], 1
          %372 = sst [smem:[%s371]] %s370
          %v373 = vrcp.pop 8.0
          %v374 = vmul.f32 8.0, %v373
          %v375 = vsub.f32 1.0, %v374
          %v376 = vmul.f32 %v373, %v375
          %v377 = vadd.f32 %v373, %v376
          %vm378 = vweird.f32 %v373
          %v379 = vsel %vm378, %v373, %v377
          %s380 = vtos %v379
          %s381 = smul.f32 %s306, %s380
          %s382 = scalar_lea.smem [#allocation6], 2
          %383 = sst [smem:[%s382]] %s381
        $region44: #{tpu_custom_call.1} parent=31 // pred_fallthru
          _
        // Predicated region
        $region45: #{tpu_custom_call.1} parent=31 // pred_check
          %p384 = pneg %p99
        $region46: #{tpu_custom_call.1} parent=31 // pred_check_branch
          %386 = sbr.rel (%p384) target = $region48
        $region47: #{tpu_custom_call.1} parent=31 // pred_region
          %388 = vsyncadd [#allocation5], 0
          %s390 = sshll.u32 %s3, 4
          %s391 = int_to_ptr.hbm [resolvable:$true] %s390
          %393 = dma.smem_to_hbm [#allocation6], 16, %s391, [#allocation5]
        $region48: #{tpu_custom_call.1} parent=31 // pred_fallthru
          _
        // Predicated region
        $region49: #{tpu_custom_call.1} parent=31 // pred_check
          %p394 = pneg %p99
        $region50: #{tpu_custom_call.1} parent=31 // pred_check_branch
          %396 = sbr.rel (%p394) target = $region52
        $region51: #{tpu_custom_call.1} parent=31 // pred_region
          %398 = dma.done [#allocation5], 16
        $region52: #{tpu_custom_call.1} parent=31 // pred_fallthru
          _
        %399 = sfence
      $region32: #{tpu_custom_call.1} parent=5 // pred_fallthru
        _
      %p400 = scmp.le.s32.totalorder 2, %s13
      // Predicated region
      $region53: #{tpu_custom_call.1} parent=5 // pred_check
        %p401 = pneg %p400
      $region54: #{tpu_custom_call.1} parent=5 // pred_check_branch
        %403 = sbr.rel (%p401) target = $region56
      $region55: #{tpu_custom_call.1} parent=5 // pred_region
        %s404 = ssub.s32 %s13, 2
      $region56: #{tpu_custom_call.1} parent=5 // pred_fallthru
        _
    $region6: #{tpu_custom_call.1} parent=1 // loop_footer
      %s17 = sadd.s32 1, %s13
    $region7: #{tpu_custom_call.1} parent=1 // loop_footer_branch
      %12 = sbr.rel target = $region3
    $region8: #{tpu_custom_call.1} parent=1 // loop_exit
      _
    %405 = vsyncpa [#allocation4], 1
    %s406 = scalar_lea.sflag [#allocation4], 1
    %407 = vsyncpa %s406, 1
    %408 = vsyncpa [#allocation5], 1
    %s409 = scalar_lea.sflag [#allocation5], 1
    %410 = vsyncpa %s409, 1

</llo_original>
